<compile_context>
chip_gen: v5e
topology: v5e:2x2
jax: 0.10.0
libtpu: 0.0.40
codegen_flags: <defaults>
</compile_context>

<pallas_src>
import functools
import math

import jax
import jax.numpy as jnp
from jax import lax
from jax.experimental import pallas as pl
from jax.experimental.pallas import tpu as pltpu


# ----------------------------------------------------------------------------
# Stage 1: fused Q/K/V projection (each projection computed exactly once).
# ----------------------------------------------------------------------------
def _qkv_proj_kernel(x_ref, w_ref, b_ref, o_ref):
    """x_ref (ts, D) bf16, w_ref (D, D) bf16, b_ref (1, D) f32 -> o_ref (ts, D) bf16."""
    y = jnp.dot(x_ref[...], w_ref[...],
                preferred_element_type=jnp.float32) + b_ref[...]
    o_ref[...] = y.astype(o_ref.dtype)


# ----------------------------------------------------------------------------
# Stage 2: flash attention over pre-projected bf16 Q/K/V + fused Wo epilogue.
# ----------------------------------------------------------------------------
def _flash_attn_kernel(q_ref, k_ref, v_ref, wo_ref, bo_ref, o_ref,
                       m_ref, l_ref, acc_ref, *, num_heads, d_k):
    """One (batch, q-tile, kv-tile) grid step.

    q_ref:  (tq, D) bf16  pre-projected, pre-scaled query tile (resident over kv)
    k_ref:  (tk, D) bf16  pre-projected key tile
    v_ref:  (tk, D) bf16  pre-projected value tile
    wo_ref: (D, D)  bf16  pre-transposed Wo
    bo_ref: (1, D)  f32   output-projection bias
    o_ref:  (tq, D)       output tile (written on the last kv step)
    scratch: m, l (tq, H) f32 ; acc (tq, D) f32
    """
    ki = pl.program_id(2)
    nk = pl.num_programs(2)

    @pl.when(ki == 0)
    def _init():
        m_ref[...] = jnp.full_like(m_ref, -jnp.inf)
        l_ref[...] = jnp.zeros_like(l_ref)
        acc_ref[...] = jnp.zeros_like(acc_ref)

    q = q_ref[...]                                                   # (tq, D)
    k = k_ref[...]                                                   # (tk, D)
    v = v_ref[...]                                                   # (tk, D)

    # Read stats once, write them back once per kv step (wide stores instead
    # of H narrow masked stores -> friendlier to the single vst slot on v5e).
    m_prev = m_ref[...]                                              # (tq, H)
    l_prev = l_ref[...]                                              # (tq, H)
    m_cols, l_cols = [], []

    # Heads handled via static lane slices (no XLU transposes).
    # NOTE: for d_k that is not a multiple of 128 these slices may incur lane
    # realignment; the fast path assumes d_k % 128 == 0 for large models.
    for h in range(num_heads):
        lo, hi = h * d_k, (h + 1) * d_k
        # scores = q_h @ k_h.T expressed via dot_general (no transpose).
        s = lax.dot_general(q[:, lo:hi], k[:, lo:hi],
                            (((1,), (1,)), ((), ())),
                            preferred_element_type=jnp.float32)      # (tq, tk)
        m_h = jnp.maximum(m_prev[:, h:h + 1],
                          jnp.max(s, axis=-1, keepdims=True))        # (tq, 1)
        alpha = jnp.exp(m_prev[:, h:h + 1] - m_h)                    # (tq, 1)
        p = jnp.exp(s - m_h)                                         # (tq, tk)
        l_cols.append(alpha * l_prev[:, h:h + 1]
                      + jnp.sum(p, axis=-1, keepdims=True))
        m_cols.append(m_h)
        pv = jnp.dot(p.astype(jnp.bfloat16), v[:, lo:hi],
                     preferred_element_type=jnp.float32)             # (tq, d_k)
        acc_ref[:, lo:hi] = alpha * acc_ref[:, lo:hi] + pv

    m_ref[...] = jnp.concatenate(m_cols, axis=-1)
    l_ref[...] = jnp.concatenate(l_cols, axis=-1)

    @pl.when(ki == nk - 1)
    def _finalize():
        # Exact divide: epilogue runs once per q-tile, off the hot path.
        inv_l = 1.0 / l_ref[...]                                     # (tq, H)
        # Normalize straight into a bf16 value (no f32 acc re-store/re-load).
        ctx = jnp.concatenate(
            [acc_ref[:, h * d_k:(h + 1) * d_k] * inv_l[:, h:h + 1]
             for h in range(num_heads)],
            axis=-1).astype(jnp.bfloat16)                            # (tq, D)
        out = jnp.dot(ctx, wo_ref[...],
                      preferred_element_type=jnp.float32) + bo_ref[...]
        o_ref[...] = out.astype(o_ref.dtype)


# ----------------------------------------------------------------------------
# Wrapper
# ----------------------------------------------------------------------------
def _pick_tile(s, cap):
    """Largest of {256,128,64,32,16,8} <= cap that divides s (MXU friendly)."""
    for t in (256, 128, 64, 32, 16, 8):
        if t <= cap and t <= s and s % t == 0:
            return t
    return s


def _tk_cap_for_device():
    """256-wide MXU on v6e/v7x wants tk=256; <=v5 (128x128 MXU) uses 128."""
    try:
        kind = jax.devices()[0].device_kind.lower()
    except Exception:
        return 256
    return 128 if any(g in kind for g in ("v2", "v3", "v4", "v5")) else 256


def _vmem_limit_bytes():
    """~75% of physical VMEM (96 MiB on v5e/v6e, 48 MiB on v7x)."""
    try:
        cap = pltpu.get_tpu_info().vmem_capacity_bytes
    except Exception:
        cap = 128 * 1024 * 1024
    return int(cap * 3 // 4)


def multi_head_attention(Q, K, V, params, num_heads):
    """Q, K, V: (B, S, D) float32.  params: PyTorch-style (out,in) weights."""
    B, S, D = Q.shape
    assert D % num_heads == 0, "d_model must be divisible by num_heads"
    d_k = D // num_heads
    scale = 1.0 / math.sqrt(d_k)

    # -- wrapper-side packing (done once) -----------------------------------
    # Pre-transpose to x @ W layout; fold the 1/sqrt(d_k) scale into Wq/bq.
    wqkv = jnp.stack([params["wq"].T * scale,
                      params["wk"].T,
                      params["wv"].T], axis=0).astype(jnp.bfloat16)   # (3, D, D)
    bqkv = jnp.stack([params["bq"] * scale,
                      params["bk"],
                      params["bv"]], axis=0)                          # (3, 1, D) f32
    wo_t = params["wo"].T.astype(jnp.bfloat16)                        # (D, D)
    bo = params["bo"]                                                 # (1, D) f32

    # bf16 activations for both kernels (halves streamed HBM bytes).
    xqkv = jnp.stack([Q, K, V], axis=0).astype(jnp.bfloat16)          # (3, B, S, D)

    # -- tiling --------------------------------------------------------------
    ts = _pick_tile(S, 256)                 # projection tile
    tq = _pick_tile(S, 128)                 # cap tq at 128 (vreg pressure)
    tk = _pick_tile(S, _tk_cap_for_device())
    # Megacore occupancy (v7x has 2 TCs): ensure >= 2 parallel blocks.
    while B * (S // tq) < 2 and tq > 8 and tq % 2 == 0:
        tq //= 2
    nq, nk = S // tq, S // tk
    vmem_limit = _vmem_limit_bytes()

    # -- Stage 1: Q/K/V projection (each computed exactly once) --------------
    proj = pl.pallas_call(
        _qkv_proj_kernel,
        out_shape=jax.ShapeDtypeStruct((3, B, S, D), jnp.bfloat16),
        grid_spec=pltpu.PrefetchScalarGridSpec(
            num_scalar_prefetch=0,
            grid=(3, B, S // ts),
            in_specs=[
                pl.BlockSpec((None, None, ts, D), lambda p, b, si: (p, b, si, 0)),
                pl.BlockSpec((None, D, D), lambda p, b, si: (p, 0, 0)),
                pl.BlockSpec((None, 1, D), lambda p, b, si: (p, 0, 0)),
            ],
            out_specs=pl.BlockSpec((None, None, ts, D),
                                   lambda p, b, si: (p, b, si, 0))),
        compiler_params=pltpu.CompilerParams(
            dimension_semantics=("parallel", "parallel", "parallel"),
            vmem_limit_bytes=vmem_limit),
        cost_estimate=pl.CostEstimate(
            flops=2 * 3 * B * S * D * D,
            transcendentals=0,
            bytes_accessed=3 * B * S * D * 2 * 2 + 3 * D * D * 2 + 3 * D * 4),
    )(xqkv, wqkv, bqkv)

    # -- Stage 2: flash attention + fused Wo projection -----------------------
    kernel = functools.partial(_flash_attn_kernel, num_heads=num_heads, d_k=d_k)
    out = pl.pallas_call(
        kernel,
        out_shape=jax.ShapeDtypeStruct((B, S, D), Q.dtype),
        grid_spec=pltpu.PrefetchScalarGridSpec(
            num_scalar_prefetch=0,
            grid=(B, nq, nk),
            in_specs=[
                # Same stacked buffer passed three times; leading index picks
                # the Q / K / V projection.  Q block is constant across kv.
                pl.BlockSpec((None, None, tq, D), lambda b, qi, ki: (0, b, qi, 0)),
                pl.BlockSpec((None, None, tk, D), lambda b, qi, ki: (1, b, ki, 0)),
                pl.BlockSpec((None, None, tk, D), lambda b, qi, ki: (2, b, ki, 0)),
                pl.BlockSpec((D, D), lambda b, qi, ki: (0, 0)),
                pl.BlockSpec((1, D), lambda b, qi, ki: (0, 0)),
            ],
            out_specs=pl.BlockSpec((None, tq, D), lambda b, qi, ki: (b, qi, 0)),
            scratch_shapes=[
                pltpu.VMEM((tq, num_heads), jnp.float32),   # running row max
                pltpu.VMEM((tq, num_heads), jnp.float32),   # running denom
                pltpu.VMEM((tq, D), jnp.float32),           # output accumulator
            ]),
        compiler_params=pltpu.CompilerParams(
            dimension_semantics=("parallel", "parallel", "arbitrary"),
            vmem_limit_bytes=vmem_limit),
        cost_estimate=pl.CostEstimate(
            flops=4 * B * S * S * D + 2 * B * S * D * D,
            transcendentals=B * num_heads * S * S,
            bytes_accessed=(B * S * D * 2            # Q (once)
                            + 2 * nq * B * S * D * 2  # K, V (per q-tile)
                            + D * D * 2 + D * 4       # Wo, bo
                            + B * S * D * 4)),        # output
    )(proj, proj, proj, wo_t, bo)
    return out


# ----------------------------------------------------------------------------
# Reference + test harness
# ----------------------------------------------------------------------------
def xavier_uniform(key, out_f, in_f):
    bound = math.sqrt(6.0 / (in_f + out_f))
    return jax.random.uniform(key, (out_f, in_f), jnp.float32, -bound, bound)


def reference_mha(Q, K, V, params, num_heads):
    """Pure-JAX f32 reference mirroring the PyTorch module."""
    B, S, D = Q.shape
    d_k = D // num_heads

    def lin(x, w, b):
        return x @ w.T + b[0]

    def split(x):
        return x.reshape(B, S, num_heads, d_k).transpose(0, 2, 1, 3)

    q = split(lin(Q, params["wq"], params["bq"]))
    k = split(lin(K, params["wk"], params["bk"]))
    v = split(lin(V, params["wv"], params["bv"]))
    scores = jnp.einsum('bhqd,bhkd->bhqk', q, k) / math.sqrt(d_k)
    attn = jax.nn.softmax(scores, axis=-1)
    ctx = jnp.einsum('bhqk,bhkd->bhqd', attn, v)
    ctx = ctx.transpose(0, 2, 1, 3).reshape(B, S, D)
    return lin(ctx, params["wo"], params["bo"])


if __name__ == "__main__":
    d_model = 32
    num_heads = 4
    batch = 2
    seq = 8

    key = jax.random.PRNGKey(0)
    keys = jax.random.split(key, 12)

    params = {
        "wq": xavier_uniform(keys[0], d_model, d_model),
        "bq": 0.1 * jax.random.normal(keys[7], (1, d_model), jnp.float32),
        "wk": xavier_uniform(keys[1], d_model, d_model),
        "bk": 0.1 * jax.random.normal(keys[8], (1, d_model), jnp.float32),
        "wv": xavier_uniform(keys[2], d_model, d_model),
        "bv": 0.1 * jax.random.normal(keys[9], (1, d_model), jnp.float32),
        "wo": xavier_uniform(keys[3], d_model, d_model),
        "bo": 0.1 * jax.random.normal(keys[10], (1, d_model), jnp.float32),
    }

    Q = jax.random.normal(keys[4], (batch, seq, d_model), jnp.float32)
    K = jax.random.normal(keys[5], (batch, seq, d_model), jnp.float32)
    V = jax.random.normal(keys[6], (batch, seq, d_model), jnp.float32)

    out = multi_head_attention(Q, K, V, params, num_heads)
    out = jax.block_until_ready(out)

    ref = reference_mha(Q, K, V, params, num_heads)
    assert out.shape == (batch, seq, d_model)
    # bf16 MXU operands / bf16 activations -> looser tolerance than pure f32.
    max_err = float(jnp.max(jnp.abs(out - ref)))
    assert jnp.allclose(out, ref, atol=7e-2, rtol=7e-2), (
        f"mismatch vs reference, max abs err = {max_err}")

    print("KERNEL_OK")
</pallas_src>

<mosaic_0001>
module attributes {stable_mosaic.version = 11 : i64} {
  func.func @_qkv_proj_kernel(%arg0: i32, %arg1: i32, %arg2: i32, %arg3: memref<1x1x8x32xbf16, #tpu.memory_space<vmem>>, %arg4: memref<1x32x32xbf16, #tpu.memory_space<vmem>>, %arg5: memref<1x1x32xf32, #tpu.memory_space<vmem>>, %arg6: memref<1x1x8x32xbf16, #tpu.memory_space<vmem>>) attributes {dimension_semantics = [#tpu.dimension_semantics<parallel>, #tpu.dimension_semantics<parallel>, #tpu.dimension_semantics<parallel>], iteration_bounds = array<i64: 3, 2, 1>, scalar_prefetch = 0 : i64, scratch_operands = 0 : i64, tpu.core_type = #tpu.core_type<tc>, window_params = [{transform_indices = @transform_0, window_bounds = array<i64: 1, 1, 8, 32>}, {transform_indices = @transform_1, window_bounds = array<i64: 1, 32, 32>}, {transform_indices = @transform_2, window_bounds = array<i64: 1, 1, 32>}, {transform_indices = @transform_3, window_bounds = array<i64: 1, 1, 8, 32>}]} {
    %c0 = arith.constant 0 : index
    %c0_0 = arith.constant 0 : index
    %c0_1 = arith.constant 0 : index
    %c0_2 = arith.constant 0 : index
    %0 = vector.load %arg3[%c0, %c0_0, %c0_1, %c0_2] : memref<1x1x8x32xbf16, #tpu.memory_space<vmem>>, vector<1x1x8x32xbf16>
    %1 = vector.shape_cast %0 : vector<1x1x8x32xbf16> to vector<8x32xbf16>
    %c0_3 = arith.constant 0 : index
    %c0_4 = arith.constant 0 : index
    %c0_5 = arith.constant 0 : index
    %2 = vector.load %arg4[%c0_3, %c0_4, %c0_5] : memref<1x32x32xbf16, #tpu.memory_space<vmem>>, vector<1x32x32xbf16>
    %3 = vector.shape_cast %2 : vector<1x32x32xbf16> to vector<32x32xbf16>
    %cst = arith.constant dense<0.000000e+00> : vector<8x32xf32>
    %4 = tpu.matmul %1, %3, %cst {dimension_numbers = #tpu.dot_dimension_numbers<[1], [0], [0], [1], [0, 0, 1, 1], [], []>} : vector<8x32xbf16>, vector<32x32xbf16>, vector<8x32xf32> -> vector<8x32xf32>
    %c0_6 = arith.constant 0 : index
    %c0_7 = arith.constant 0 : index
    %c0_8 = arith.constant 0 : index
    %5 = vector.load %arg5[%c0_6, %c0_7, %c0_8] : memref<1x1x32xf32, #tpu.memory_space<vmem>>, vector<1x1x32xf32>
    %6 = vector.shape_cast %5 : vector<1x1x32xf32> to vector<1x32xf32>
    %7 = vector.broadcast %6 : vector<1x32xf32> to vector<8x32xf32>
    %8 = arith.addf %4, %7 : vector<8x32xf32>
    %9 = arith.truncf %8 : vector<8x32xf32> to vector<8x32xbf16>
    %c0_9 = arith.constant 0 : index
    %c0_10 = arith.constant 0 : index
    %c0_11 = arith.constant 0 : index
    %c0_12 = arith.constant 0 : index
    %10 = vector.load %arg6[%c0_9, %c0_10, %c0_11, %c0_12] : memref<1x1x8x32xbf16, #tpu.memory_space<vmem>>, vector<1x1x8x32xbf16>
    %11 = vector.shape_cast %10 : vector<1x1x8x32xbf16> to vector<8x32xbf16>
    %12 = vector.shape_cast %9 : vector<8x32xbf16> to vector<1x1x8x32xbf16>
    tpu.vector_store %arg6[%c0_9, %c0_10, %c0_11, %c0_12], %12 {strides = array<i32>} : memref<1x1x8x32xbf16, #tpu.memory_space<vmem>>, vector<1x1x8x32xbf16>,
    return
  }
  func.func @transform_0(%arg0: i32, %arg1: i32, %arg2: i32) -> (i32, i32, i32, i32) {
    %c0_i32 = arith.constant 0 : i32
    %c0_i32_0 = arith.constant 0 : i32
    return %arg0, %arg1, %arg2, %c0_i32 : i32, i32, i32, i32
  }
  func.func @transform_1(%arg0: i32, %arg1: i32, %arg2: i32) -> (i32, i32, i32) {
    %c0_i32 = arith.constant 0 : i32
    %c0_i32_0 = arith.constant 0 : i32
    %c0_i32_1 = arith.constant 0 : i32
    return %arg0, %c0_i32, %c0_i32_0 : i32, i32, i32
  }
  func.func @transform_2(%arg0: i32, %arg1: i32, %arg2: i32) -> (i32, i32, i32) {
    %c0_i32 = arith.constant 0 : i32
    %c0_i32_0 = arith.constant 0 : i32
    %c0_i32_1 = arith.constant 0 : i32
    return %arg0, %c0_i32, %c0_i32_0 : i32, i32, i32
  }
  func.func @transform_3(%arg0: i32, %arg1: i32, %arg2: i32) -> (i32, i32, i32, i32) {
    %c0_i32 = arith.constant 0 : i32
    %c0_i32_0 = arith.constant 0 : i32
    return %arg0, %arg1, %arg2, %c0_i32 : i32, i32, i32, i32
  }
}

</mosaic_0001>

<llo_original>
// kernel: tpu_custom_call.1
$region0: #{tpu_custom_call.1}
  #allocation0 [shape = 'u32[]', space=smem, size = 0x4, offset = 0x4, fixed_abs, tag = 'smem constant byte address 0x4 - core index']
  #allocation1 [shape = 'u32[72,128]{1,0:T(1,128)}', space=vmem, size = 0x9000, scoped, tag = 'internal scratch']
  %s0 = inlined_call_operand.hbm [shape: bf16[3,2,8,32], index: 0, kind: input, shape index: {}]
  %s1 = inlined_call_operand.hbm [shape: bf16[3,32,32], index: 1, kind: input, shape index: {}]
  %s2 = inlined_call_operand.hbm [shape: f32[3,1,32], index: 2, kind: input, shape index: {}]
  %s3 = inlined_call_operand.hbm [shape: bf16[3,2,8,32], index: 3, kind: output, shape index: {}]
  %s4 = sld [smem:[#allocation0]]
  $region57: #{tpu_custom_call.1} parent=0
    _
  %s6 = ssub.s32 1, %s4
  %s7 = scalar_select 0, %s6, %s4
  $region1: #{tpu_custom_call.1} parent=0
    #allocation2 [shape = 'u8[4096]{0}', space=vmem, size = 0x1000, scoped, tag = 'input window, operand 0']
    #allocation3 [shape = 's32[2]{0}', space=sflag, size = 0x8, scoped, tag = 'scoped memory for tpu_custom_call.1']
    #allocation4 [shape = 's32[2]{0}', space=sflag, size = 0x8, scoped, tag = 'scoped memory for tpu_custom_call.1']
    #allocation5 [shape = 'u8[16384]{0}', space=vmem, size = 0x4000, scoped, tag = 'input window, operand 1']
    #allocation6 [shape = 's32[2]{0}', space=sflag, size = 0x8, scoped, tag = 'scoped memory for tpu_custom_call.1']
    #allocation7 [shape = 'u8[1024]{0}', space=vmem, size = 0x400, scoped, tag = 'input window, operand 2']
    #allocation8 [shape = 'u8[4096]{0}', space=vmem, size = 0x1000, scoped, tag = 'output window, operand 0']
    %8 = vsyncpa [#allocation3], 0
    %s9 = scalar_lea.sflag [#allocation3], 1
    %10 = vsyncpa %s9, 0
    %11 = vsyncpa [#allocation6], 0
    %s12 = scalar_lea.sflag [#allocation6], 1
    %13 = vsyncpa %s12, 0
    %14 = vsyncpa [#allocation4], 0
    %s15 = scalar_lea.sflag [#allocation4], 1
    %16 = vsyncpa %s15, 0
    loop: start=0, step=1, limit=8
    $region2: #{tpu_custom_call.1} parent=1 // loop_pre_header
      _
    $region3: #{tpu_custom_call.1} parent=1 // loop_header
      %s18 = sphi 0, %s22
      %p19 = scmp.ge.s32.totalorder %s18, 8
      %s25 = sphi 0, %s44
      %s26 = sphi 0, %s40
      %s27 = sphi 0, %s36
      %s28 = sphi 0, %s25
      %s29 = sphi 0, %s26
      %s30 = sphi 0, %s27
      %s31 = sphi 0, %s28
      %s32 = sphi 0, %s29
      %s33 = sphi 0, %s30
      %s51 = sphi 0, %s53
      %s54 = sphi 0, %s51
      %s55 = sphi 0, %s54
      %s71 = sphi 0, %s55
      %s77 = sphi 0, %s79
      %s80 = sphi 0, %s77
      %s81 = sphi 0, %s80
      %s97 = sphi 0, %s81
      %s103 = sphi 0, %s105
      %s106 = sphi 0, %s103
      %s107 = sphi 0, %s106
      %s123 = sphi 0, %s107
      %s133 = sphi 0, %s135
      %s136 = sphi 0, %s133
      %s137 = sphi 0, %s136
      %s153 = sphi 0, %s137
    $region4: #{tpu_custom_call.1} parent=1 // loop_header_branch
      %21 = sbr.rel (%p19) target = $region8
    $region5: #{tpu_custom_call.1} parent=1 // loop_body
      %s23 = ssub.s32 %s18, 1
      %s24 = ssub.s32 %s18, 2
      %s34 = sadd.s32 1, %s27
      %p35 = scmp.ge.s32.totalorder %s34, 1
      %s36 = scalar_select %p35, 0, %s34
      %s37 = sadd.s32 1, %s26
      %s38 = scalar_select %p35, %s37, %s26
      %p39 = scmp.ge.s32.totalorder %s38, 2
      %s40 = scalar_select %p39, 0, %s38
      %s41 = sadd.s32 1, %s25
      %s42 = scalar_select %p39, %s41, %s25
      %p43 = scmp.ge.s32.totalorder %s42, 3
      %s44 = scalar_select %p43, 0, %s42
      %s45 = ssub.s32 %s25, %s44
      %s46 = ssub.s32 %s26, %s40
      %s47 = sor.u32 %s45, %s46
      %s48 = ssub.s32 %s27, %s36
      %s49 = sor.u32 %s47, %s48
      %p50 = scmp.eq.s32.totalorder %s49, 0
      %s52 = sadd.s32 %s51, 1
      %s53 = scalar_select %p50, %s51, %s52
      %p56 = pneg %p50
      %p57 = scmp.eq.s32.totalorder %s18, 5
      %p58 = por %p56, %p57
      %p59 = scmp.ne.s32.totalorder %s51, %s54
      %p60 = scmp.eq.s32.totalorder %s18, 0
      %p61 = por %p59, %p60
      %p62 = scmp.ne.s32.totalorder %s51, %s54
      %p63 = scmp.eq.s32.totalorder %s23, 5
      %p64 = por %p62, %p63
      %p65 = scmp.ne.s32.totalorder %s54, %s55
      %p66 = scmp.eq.s32.totalorder %s23, 0
      %p67 = por %p65, %p66
      %p68 = scmp.ne.s32.totalorder %s54, %s55
      %p69 = scmp.eq.s32.totalorder %s24, 5
      %p70 = por %p68, %p69
      %p72 = scmp.ne.s32.totalorder %s55, %s71
      %p73 = scmp.eq.s32.totalorder %s24, 0
      %p74 = por %p72, %p73
      %s75 = ssub.s32 %s25, %s44
      %p76 = scmp.eq.s32.totalorder %s75, 0
      %s78 = sadd.s32 %s77, 1
      %s79 = scalar_select %p76, %s77, %s78
      %p82 = pneg %p76
      %p83 = scmp.eq.s32.totalorder %s18, 5
      %p84 = por %p82, %p83
      %p85 = scmp.ne.s32.totalorder %s77, %s80
      %p86 = scmp.eq.s32.totalorder %s18, 0
      %p87 = por %p85, %p86
      %p88 = scmp.ne.s32.totalorder %s77, %s80
      %p89 = scmp.eq.s32.totalorder %s23, 5
      %p90 = por %p88, %p89
      %p91 = scmp.ne.s32.totalorder %s80, %s81
      %p92 = scmp.eq.s32.totalorder %s23, 0
      %p93 = por %p91, %p92
      %p94 = scmp.ne.s32.totalorder %s80, %s81
      %p95 = scmp.eq.s32.totalorder %s24, 5
      %p96 = por %p94, %p95
      %p98 = scmp.ne.s32.totalorder %s81, %s97
      %p99 = scmp.eq.s32.totalorder %s24, 0
      %p100 = por %p98, %p99
      %s101 = ssub.s32 %s25, %s44
      %p102 = scmp.eq.s32.totalorder %s101, 0
      %s104 = sadd.s32 %s103, 1
      %s105 = scalar_select %p102, %s103, %s104
      %p108 = pneg %p102
      %p109 = scmp.eq.s32.totalorder %s18, 5
      %p110 = por %p108, %p109
      %p111 = scmp.ne.s32.totalorder %s103, %s106
      %p112 = scmp.eq.s32.totalorder %s18, 0
      %p113 = por %p111, %p112
      %p114 = scmp.ne.s32.totalorder %s103, %s106
      %p115 = scmp.eq.s32.totalorder %s23, 5
      %p116 = por %p114, %p115
      %p117 = scmp.ne.s32.totalorder %s106, %s107
      %p118 = scmp.eq.s32.totalorder %s23, 0
      %p119 = por %p117, %p118
      %p120 = scmp.ne.s32.totalorder %s106, %s107
      %p121 = scmp.eq.s32.totalorder %s24, 5
      %p122 = por %p120, %p121
      %p124 = scmp.ne.s32.totalorder %s107, %s123
      %p125 = scmp.eq.s32.totalorder %s24, 0
      %p126 = por %p124, %p125
      %s127 = ssub.s32 %s25, %s44
      %s128 = ssub.s32 %s26, %s40
      %s129 = sor.u32 %s127, %s128
      %s130 = ssub.s32 %s27, %s36
      %s131 = sor.u32 %s129, %s130
      %p132 = scmp.eq.s32.totalorder %s131, 0
      %s134 = sadd.s32 %s133, 1
      %s135 = scalar_select %p132, %s133, %s134
      %p138 = pneg %p132
      %p139 = scmp.eq.s32.totalorder %s18, 5
      %p140 = por %p138, %p139
      %p141 = scmp.ne.s32.totalorder %s133, %s136
      %p142 = scmp.eq.s32.totalorder %s18, 0
      %p143 = por %p141, %p142
      %p144 = scmp.ne.s32.totalorder %s133, %s136
      %p145 = scmp.eq.s32.totalorder %s23, 5
      %p146 = por %p144, %p145
      %p147 = scmp.ne.s32.totalorder %s136, %s137
      %p148 = scmp.eq.s32.totalorder %s23, 0
      %p149 = por %p147, %p148
      %p150 = scmp.ne.s32.totalorder %s136, %s137
      %p151 = scmp.eq.s32.totalorder %s24, 5
      %p152 = por %p150, %p151
      %p154 = scmp.ne.s32.totalorder %s137, %s153
      %p155 = scmp.eq.s32.totalorder %s24, 0
      %p156 = por %p154, %p155
      %p157 = scmp.le.s32.totalorder 1, %s18
      %p158 = scmp.lt.s32.totalorder %s18, 7
      %p159 = pnand %p157, %p158
      %p160 = pneg %p159
      // Predicated region
      $region9: #{tpu_custom_call.1} parent=5 // pred_check
        _
      $region10: #{tpu_custom_call.1} parent=5 // pred_check_branch
        %162 = sbr.rel (%p159) target = $region12
      $region11: #{tpu_custom_call.1} parent=5 // pred_region
        %s163 = ssub.s32 %s18, 1
      $region12: #{tpu_custom_call.1} parent=5 // pred_fallthru
        _
      %p164 = scmp.lt.s32.totalorder %s18, 6
      // Predicated region
      $region13: #{tpu_custom_call.1} parent=5 // pred_check
        %p165 = pneg %p164
      $region14: #{tpu_custom_call.1} parent=5 // pred_check_branch
        %167 = sbr.rel (%p165) target = $region16
      $region15: #{tpu_custom_call.1} parent=5 // pred_region
        // Predicated region
        $region17: #{tpu_custom_call.1} parent=15 // pred_check
          %p168 = pneg %p61
        $region18: #{tpu_custom_call.1} parent=15 // pred_check_branch
          %170 = sbr.rel (%p168) target = $region20
        $region19: #{tpu_custom_call.1} parent=15 // pred_region
          %s171 = sand.u32 %s51, 1
          %s172 = scalar_lea.sflag [#allocation3], %s171
          %s173 = sand.u32 %s51, 1
          %s174 = smul.addr %s173, 4
          %s175 = scalar_lea.vmem [#allocation2], %s174
          %177 = vsyncadd %s172, 0
          %s178 = sadd.s32 %s27, %s26
          %s179 = smul.addr %s25, 2
          %s180 = sadd.s32 %s178, %s179
          %s181 = smul.addr %s180, 4
          %s182 = scalar_lea.hbm %s0, %s181
          %s184 = sshll.u32 %s182, 4
          %s185 = int_to_ptr.hbm [resolvable:$true] %s184
          %s186 = sshll.u32 %s175, 4
          %s187 = int_to_ptr.vmem [resolvable:$true] %s186
          %189 = dma.hbm_to_vmem [thread:$0]  %s185, 64, %s187, %s172
        $region20: #{tpu_custom_call.1} parent=15 // pred_fallthru
          _
        // Predicated region
        $region21: #{tpu_custom_call.1} parent=15 // pred_check
          %p190 = pneg %p87
        $region22: #{tpu_custom_call.1} parent=15 // pred_check_branch
          %192 = sbr.rel (%p190) target = $region24
        $region23: #{tpu_custom_call.1} parent=15 // pred_region
          %s193 = sand.u32 %s18, 1
          %s194 = scalar_lea.sflag [#allocation6], %s193
          %s195 = sand.u32 %s77, 1
          %s196 = smul.addr %s195, 16
          %s197 = scalar_lea.vmem [#allocation5], %s196
          %199 = vsyncadd %s194, 0
          %s200 = smul.addr %s25, 4
          %s201 = smul.addr %s200, 4
          %s202 = scalar_lea.hbm %s1, %s201
          %s203 = sshll.u32 %s202, 4
          %s204 = int_to_ptr.hbm [resolvable:$true] %s203
          %s205 = sshll.u32 %s197, 4
          %s206 = int_to_ptr.vmem [resolvable:$true] %s205
          %211 = dma.hbm_to_vmem [thread:$0]  %s204, 256, %s206, %s194, 64, 64, 4
        $region24: #{tpu_custom_call.1} parent=15 // pred_fallthru
          _
        // Predicated region
        $region25: #{tpu_custom_call.1} parent=15 // pred_check
          %p212 = pneg %p113
        $region26: #{tpu_custom_call.1} parent=15 // pred_check_branch
          %214 = sbr.rel (%p212) target = $region28
        $region27: #{tpu_custom_call.1} parent=15 // pred_region
          %s215 = sand.u32 %s18, 1
          %s216 = scalar_lea.sflag [#allocation6], %s215
          %s217 = sand.u32 %s103, 1
          %s218 = scalar_lea.vmem [#allocation7], %s217
          %220 = vsyncadd %s216, 0
          %s221 = scalar_lea.hbm %s2, %s25
          %s223 = sshll.u32 %s221, 4
          %s224 = int_to_ptr.hbm [resolvable:$true] %s223
          %s225 = sshll.u32 %s218, 4
          %s226 = int_to_ptr.vmem [resolvable:$true] %s225
          %228 = dma.hbm_to_vmem [thread:$0]  %s224, 16, %s226, %s216
        $region28: #{tpu_custom_call.1} parent=15 // pred_fallthru
          _
      $region16: #{tpu_custom_call.1} parent=5 // pred_fallthru
        _
      %p229 = scmp.le.s32.totalorder 1, %s18
      %p230 = scmp.lt.s32.totalorder %s18, 7
      %p231 = pnand %p229, %p230
      %p232 = pneg %p231
      // Predicated region
      $region29: #{tpu_custom_call.1} parent=5 // pred_check
        _
      $region30: #{tpu_custom_call.1} parent=5 // pred_check_branch
        %234 = sbr.rel (%p231) target = $region32
      $region31: #{tpu_custom_call.1} parent=5 // pred_region
        %s235 = ssub.s32 %s18, 1
        %s236 = sand.u32 %s54, 1
        %s237 = scalar_lea.sflag [#allocation3], %s236
        %s238 = sand.u32 %s54, 1
        %s239 = smul.addr %s238, 4
        %s240 = scalar_lea.vmem [#allocation2], %s239
        // Predicated region
        $region33: #{tpu_custom_call.1} parent=31 // pred_check
          %p241 = pneg %p67
        $region34: #{tpu_custom_call.1} parent=31 // pred_check_branch
          %243 = sbr.rel (%p241) target = $region36
        $region35: #{tpu_custom_call.1} parent=31 // pred_region
          %245 = dma.done %s237, 64
        $region36: #{tpu_custom_call.1} parent=31 // pred_fallthru
          _
        %s246 = sand.u32 %s23, 1
        %s247 = scalar_lea.sflag [#allocation6], %s246
        %s248 = sand.u32 %s80, 1
        %s249 = smul.addr %s248, 16
        %s250 = scalar_lea.vmem [#allocation5], %s249
        // Predicated region
        $region37: #{tpu_custom_call.1} parent=31 // pred_check
          %p251 = pneg %p93
        $region38: #{tpu_custom_call.1} parent=31 // pred_check_branch
          %253 = sbr.rel (%p251) target = $region40
        $region39: #{tpu_custom_call.1} parent=31 // pred_region
          %255 = dma.done %s247, 256
        $region40: #{tpu_custom_call.1} parent=31 // pred_fallthru
          _
        %s256 = sand.u32 %s23, 1
        %s257 = scalar_lea.sflag [#allocation6], %s256
        %s258 = sand.u32 %s106, 1
        %s259 = scalar_lea.vmem [#allocation7], %s258
        // Predicated region
        $region41: #{tpu_custom_call.1} parent=31 // pred_check
          %p260 = pneg %p119
        $region42: #{tpu_custom_call.1} parent=31 // pred_check_branch
          %262 = sbr.rel (%p260) target = $region44
        $region43: #{tpu_custom_call.1} parent=31 // pred_region
          %264 = dma.done %s257, 16
        $region44: #{tpu_custom_call.1} parent=31 // pred_fallthru
          _
        %s265 = sand.u32 %s54, 1
        %s266 = scalar_lea.sflag [#allocation3], %s265
        %s267 = sand.u32 %s54, 1
        %s268 = smul.addr %s267, 4
        %s269 = scalar_lea.vmem [#allocation2], %s268
        %p270 = pneg %p67
        %p271 = pneg %p64
        %s272 = sand.u32 %s23, 1
        %s273 = scalar_lea.sflag [#allocation6], %s272
        %s274 = sand.u32 %s80, 1
        %s275 = smul.addr %s274, 16
        %s276 = scalar_lea.vmem [#allocation5], %s275
        %p277 = pneg %p93
        %p278 = pneg %p90
        %s279 = sand.u32 %s23, 1
        %s280 = scalar_lea.sflag [#allocation6], %s279
        %s281 = sand.u32 %s106, 1
        %s282 = scalar_lea.vmem [#allocation7], %s281
        %p283 = pneg %p119
        %p284 = pneg %p116
        %p285 = pneg %p149
        %p286 = pneg %p146
        %s287 = sand.u32 %s136, 1
        %s288 = scalar_lea.sflag [#allocation4], %s287
        %s289 = sand.u32 %s136, 1
        %s290 = smul.addr %s289, 4
        %s291 = scalar_lea.vmem [#allocation8], %s290
        %v293 = vld [vmem:[%s240] sm:$0xf]
        %v294 = vld [vmem:[%s250] sm:$0xf]
        %v295 = vld [vmem:[%s250 + $0x4] sm:$0xf]
        %v296 = vld [vmem:[%s250 + $0x8] sm:$0xf]
        %v297 = vld [vmem:[%s250 + $0xc] sm:$0xf]
        %v298 = vld [vmem:[%s259] sm:$0x1]
        %v300 = vperm.slane %v298, 0
        %v306 = vunpack.c.l.b16 %v294
        %v307 = vunpack.c.l.b16 %v295
        %v308 = vunpack.c.l.b16 %v296
        %v309 = vunpack.c.l.b16 %v297
        %v310 = vpack.c.b16 %v307, %v306
        %v311 = vpack.c.b16 %v309, %v308
        %vm314 = vcmask 261120
        %v316 = vsel %vm314, %v293, 0
        %318 = vmatpush.bf16.msra.mxu0 0
        %319 = vmatpush.bf16.msra.mxu0 0
        %320 = vmatpush.bf16.msra.mxu0 0
        %321 = vmatpush.bf16.msra.mxu0 0
        %322 = vmatpush.bf16.msra.mxu0 0
        %323 = vmatpush.bf16.msra.mxu0 0
        %324 = vmatpush.bf16.msra.mxu0 %v311
        %325 = vmatpush.bf16.msra.mxu0 %v310
        %326 = vmatmul.bf16.gmra.mxu0 %v316
        %v327 = vpop.f32.mrf.mxu0
        %v328 = vadd.f32 %v300, %v327
        %v329 = vpop.f32.mrf.mxu0
        %330 = vdwg.mxu0
        %v331 = vpack.c.bf16 %v328, %v328
        %vm332 = vcmask 257024
        %333 = vst.msk [vmem:[%s291] sm:$0xf] %vm332, %v331
        %s334 = sand.u32 %s136, 1
        %s335 = scalar_lea.sflag [#allocation4], %s334
        %s336 = sand.u32 %s136, 1
        %s337 = smul.addr %s336, 4
        %s338 = scalar_lea.vmem [#allocation8], %s337
        // Predicated region
        $region45: #{tpu_custom_call.1} parent=31 // pred_check
          %p339 = pneg %p146
        $region46: #{tpu_custom_call.1} parent=31 // pred_check_branch
          %341 = sbr.rel (%p339) target = $region48
        $region47: #{tpu_custom_call.1} parent=31 // pred_region
          %343 = vsyncadd %s335, 0
          %s344 = sadd.s32 %s30, %s29
          %s345 = smul.addr %s28, 2
          %s346 = sadd.s32 %s344, %s345
          %s347 = smul.addr %s346, 4
          %s348 = scalar_lea.hbm %s3, %s347
          %s350 = sshll.u32 %s338, 4
          %s351 = int_to_ptr.vmem [resolvable:$true] %s350
          %s352 = sshll.u32 %s348, 4
          %s353 = int_to_ptr.hbm [resolvable:$true] %s352
          %355 = dma.vmem_to_hbm [thread:$0]  %s351, 64, %s353, %s335
        $region48: #{tpu_custom_call.1} parent=31 // pred_fallthru
          _
      $region32: #{tpu_custom_call.1} parent=5 // pred_fallthru
        _
      %p356 = scmp.le.s32.totalorder 2, %s18
      // Predicated region
      $region49: #{tpu_custom_call.1} parent=5 // pred_check
        %p357 = pneg %p356
      $region50: #{tpu_custom_call.1} parent=5 // pred_check_branch
        %359 = sbr.rel (%p357) target = $region52
      $region51: #{tpu_custom_call.1} parent=5 // pred_region
        %s360 = ssub.s32 %s18, 2
        // Predicated region
        $region53: #{tpu_custom_call.1} parent=51 // pred_check
          %p361 = pneg %p152
        $region54: #{tpu_custom_call.1} parent=51 // pred_check_branch
          %363 = sbr.rel (%p361) target = $region56
        $region55: #{tpu_custom_call.1} parent=51 // pred_region
          %s364 = sand.u32 %s137, 1
          %s365 = scalar_lea.sflag [#allocation4], %s364
          %s366 = sand.u32 %s137, 1
          %s367 = smul.addr %s366, 4
          %s368 = scalar_lea.vmem [#allocation8], %s367
          %370 = dma.done %s365, 64
        $region56: #{tpu_custom_call.1} parent=51 // pred_fallthru
          _
      $region52: #{tpu_custom_call.1} parent=5 // pred_fallthru
        _
    $region6: #{tpu_custom_call.1} parent=1 // loop_footer
      %s22 = sadd.s32 1, %s18
    $region7: #{tpu_custom_call.1} parent=1 // loop_footer_branch
      %17 = sbr.rel target = $region3
    $region8: #{tpu_custom_call.1} parent=1 // loop_exit
      _
    %371 = vsyncpa [#allocation3], 1
    %s372 = scalar_lea.sflag [#allocation3], 1
    %373 = vsyncpa %s372, 1
    %374 = vsyncpa [#allocation6], 1
    %s375 = scalar_lea.sflag [#allocation6], 1
    %376 = vsyncpa %s375, 1
    %377 = vsyncpa [#allocation4], 1
    %s378 = scalar_lea.sflag [#allocation4], 1
    %379 = vsyncpa %s378, 1

</llo_original>
